<compile_context>
chip_gen: v6e
topology: v6e:2x2x1
jax: 0.10.0
libtpu: 0.0.40
codegen_flags: <defaults>
</compile_context>

<pallas_src>
import functools

import jax
import jax.numpy as jnp
from jax.experimental import pallas as pl
from jax.experimental.pallas import tpu as pltpu


def _global_avg_pool1d_kernel(x_ref, o_ref, acc_ref, *, L, TL, inv_L, needs_mask):
    # x_ref  : (TB, TL, D) input tile
    # o_ref  : (TB, D)     output tile (resident across the L grid axis)
    # acc_ref: (TB, D)     f32 accumulator scratch
    l = pl.program_id(1)

    @pl.when(l == 0)
    def _init():
        acc_ref[...] = jnp.zeros_like(acc_ref)

    x = x_ref[...]
    if needs_mask:
        # Zero rows past the true end of the pooled axis (last, partial L tile).
        row = jax.lax.broadcasted_iota(jnp.int32, x.shape, 1)
        x = jnp.where(l * TL + row < L, x, jnp.zeros((), x.dtype))
    # Fuse the widen into the reduction: no explicit f32 copy of the tile.
    acc_ref[...] += jnp.sum(x, axis=1, dtype=jnp.float32)

    @pl.when(l == pl.num_programs(1) - 1)
    def _finalize():
        o_ref[...] = (acc_ref[...] * jnp.float32(inv_L)).astype(o_ref.dtype)


def global_avg_pool1d(x, dim=1, *, target_tile_bytes=2 * 1024 * 1024):
    """Mean over `dim` (default 1) of a (B, L, D) tensor via a tiled Pallas reduction."""
    # TODO(synk): only the module-default dim=1 on a rank-3 (B, L, D) input is implemented.
    assert dim == 1 and x.ndim == 3, "kernel implements the module default dim=1 on (B, L, D)"
    B, L, D = x.shape
    bytes_per_elem = jnp.dtype(x.dtype).itemsize
    sub = max(8, 32 // bytes_per_elem)  # sublane packing: 8 (f32), 16 (bf16), 32 (i8)

    # Batch rows per step: keeps the (TB, D) output block sublane-dense and
    # amortizes per-grid-step overhead. If TB != B it must be a multiple of 8.
    TB = B if B <= 8 else 8

    # Size the L tile so one input buffer is ~target_tile_bytes (double-buffered
    # by the pipeline this stays well under the scoped VMEM limit on every gen,
    # including v7x's 64 MiB). Keep TL a multiple of the sublane packing.
    per_row_bytes = TB * D * bytes_per_elem
    TL = max(sub, (target_tile_bytes // max(1, per_row_bytes)) // sub * sub)
    if TL >= L:
        TL = L  # full axis: no (8,128)-divisibility requirement, single L step

    needs_mask = (L % TL) != 0
    kernel = functools.partial(
        _global_avg_pool1d_kernel,
        L=L, TL=TL, inv_L=1.0 / float(L), needs_mask=needs_mask,
    )

    return pl.pallas_call(
        kernel,
        out_shape=jax.ShapeDtypeStruct((B, D), x.dtype),
        grid_spec=pltpu.PrefetchScalarGridSpec(
            num_scalar_prefetch=0,
            grid=(pl.cdiv(B, TB), pl.cdiv(L, TL)),
            in_specs=[
                # NOTE: with small tiles, pipeline_mode=pl.Buffered(3) is a
                # candidate to hide DMA issue latency — sweep if needed.
                pl.BlockSpec((TB, TL, D), lambda b, l: (b, l, 0)),
            ],
            out_specs=pl.BlockSpec((TB, D), lambda b, l: (b, 0)),
            scratch_shapes=[pltpu.VMEM((TB, D), jnp.float32)],
        ),
        compiler_params=pltpu.CompilerParams(
            # batch axis parallel (megacore on v7x), reduction axis arbitrary.
            dimension_semantics=("parallel", "arbitrary"),
        ),
    )(x)


if __name__ == "__main__":
    key = jax.random.PRNGKey(0)

    # Small case matching the module's canonical usage.
    B, L, D = 2, 8, 32
    x_small = jax.random.normal(key, (B, L, D), dtype=jnp.float32)
    out_small = jax.block_until_ready(global_avg_pool1d(x_small, dim=1))
    ref_small = jnp.mean(x_small, axis=1)
    assert out_small.shape == (B, D)
    assert jnp.allclose(out_small, ref_small, atol=1e-6, rtol=1e-6)

    # Larger case that exercises the tiled-L reduction path + boundary masking.
    B2, L2, D2 = 4, 520, 256
    x_big = jax.random.normal(jax.random.PRNGKey(1), (B2, L2, D2), dtype=jnp.float32)
    out_big = jax.block_until_ready(global_avg_pool1d(x_big, dim=1))
    ref_big = jnp.mean(x_big, axis=1)
    assert out_big.shape == (B2, D2)
    assert jnp.allclose(out_big, ref_big, atol=1e-5, rtol=1e-5)

    print("KERNEL_OK")
</pallas_src>

<mosaic_0001>
module attributes {stable_mosaic.version = 11 : i64} {
  func.func @_global_avg_pool1d_kernel(%arg0: i32, %arg1: i32, %arg2: memref<2x8x32xf32, #tpu.memory_space<vmem>>, %arg3: memref<2x32xf32, #tpu.memory_space<vmem>>, %arg4: memref<2x32xf32, #tpu.memory_space<vmem>>) attributes {dimension_semantics = [#tpu.dimension_semantics<parallel>, #tpu.dimension_semantics<arbitrary>], iteration_bounds = array<i64: 1, 1>, scalar_prefetch = 0 : i64, scratch_operands = 1 : i64, tpu.core_type = #tpu.core_type<tc>, window_params = [{transform_indices = @transform_0, window_bounds = array<i64: 2, 8, 32>}, {transform_indices = @transform_1, window_bounds = array<i64: 2, 32>}]} {
    %c0_i32 = arith.constant 0 : i32
    %0 = arith.cmpi eq, %arg1, %c0_i32 : i32
    %1 = arith.extui %0 : i1 to i32
    %c0_i32_0 = arith.constant 0 : i32
    %2 = arith.cmpi ne, %1, %c0_i32_0 : i32
    scf.if %2 {
      %cst_9 = arith.constant 0.000000e+00 : f32
      %11 = vector.broadcast %cst_9 : f32 to vector<2x32xf32>
      %c0_10 = arith.constant 0 : index
      %c0_11 = arith.constant 0 : index
      %12 = vector.load %arg4[%c0_10, %c0_11] : memref<2x32xf32, #tpu.memory_space<vmem>>, vector<2x32xf32>
      tpu.vector_store %arg4[%c0_10, %c0_11], %11 {strides = array<i32>} : memref<2x32xf32, #tpu.memory_space<vmem>>, vector<2x32xf32>,
    } else {
    }
    %c0 = arith.constant 0 : index
    %c0_1 = arith.constant 0 : index
    %c0_2 = arith.constant 0 : index
    %3 = vector.load %arg2[%c0, %c0_1, %c0_2] : memref<2x8x32xf32, #tpu.memory_space<vmem>>, vector<2x8x32xf32>
    %c0_3 = arith.constant 0 : index
    %c0_4 = arith.constant 0 : index
    %4 = vector.load %arg4[%c0_3, %c0_4] : memref<2x32xf32, #tpu.memory_space<vmem>>, vector<2x32xf32>
    %cst = arith.constant dense<0.000000e+00> : vector<2x32xf32>
    %5 = vector.multi_reduction <add>, %3, %cst [1] : vector<2x8x32xf32> to vector<2x32xf32>
    %6 = arith.addf %4, %5 : vector<2x32xf32>
    %c0_5 = arith.constant 0 : index
    %c0_6 = arith.constant 0 : index
    %7 = vector.load %arg4[%c0_5, %c0_6] : memref<2x32xf32, #tpu.memory_space<vmem>>, vector<2x32xf32>
    tpu.vector_store %arg4[%c0_5, %c0_6], %6 {strides = array<i32>} : memref<2x32xf32, #tpu.memory_space<vmem>>, vector<2x32xf32>,
    %c0_i32_7 = arith.constant 0 : i32
    %8 = arith.cmpi eq, %arg1, %c0_i32_7 : i32
    %9 = arith.extui %8 : i1 to i32
    %c0_i32_8 = arith.constant 0 : i32
    %10 = arith.cmpi ne, %9, %c0_i32_8 : i32
    scf.if %10 {
      %c0_9 = arith.constant 0 : index
      %c0_10 = arith.constant 0 : index
      %11 = vector.load %arg4[%c0_9, %c0_10] : memref<2x32xf32, #tpu.memory_space<vmem>>, vector<2x32xf32>
      %cst_11 = arith.constant 1.250000e-01 : f32
      %12 = vector.broadcast %cst_11 : f32 to vector<2x32xf32>
      %13 = arith.mulf %11, %12 : vector<2x32xf32>
      %c0_12 = arith.constant 0 : index
      %c0_13 = arith.constant 0 : index
      %14 = vector.load %arg3[%c0_12, %c0_13] : memref<2x32xf32, #tpu.memory_space<vmem>>, vector<2x32xf32>
      tpu.vector_store %arg3[%c0_12, %c0_13], %13 {strides = array<i32>} : memref<2x32xf32, #tpu.memory_space<vmem>>, vector<2x32xf32>,
    } else {
    }
    return
  }
  func.func @transform_0(%arg0: i32, %arg1: i32) -> (i32, i32, i32) {
    %c0_i32 = arith.constant 0 : i32
    %c0_i32_0 = arith.constant 0 : i32
    return %arg0, %arg1, %c0_i32 : i32, i32, i32
  }
  func.func @transform_1(%arg0: i32, %arg1: i32) -> (i32, i32) {
    %c0_i32 = arith.constant 0 : i32
    %c0_i32_0 = arith.constant 0 : i32
    return %arg0, %c0_i32 : i32, i32
  }
}

</mosaic_0001>

<llo_original>
// kernel: tpu_custom_call.1
$region0: #{tpu_custom_call.1}
  #allocation0 [shape = 'u32[]', space=smem, size = 0x4, offset = 0x4, fixed_abs, tag = 'smem constant byte address 0x4 - core index']
  #allocation1 [shape = 'u32[144,128]{1,0:T(1,128)}', space=vmem, size = 0x12000, scoped, tag = 'internal scratch']
  #allocation2 [shape = 'f32[2,32]{1,0:T(2,128)}', space=vmem, size = 0x400, scoped, tag = 'scratch operand']
  %s0 = inlined_call_operand.hbm [shape: f32[2,8,32], index: 0, kind: input, shape index: {}]
  %s1 = inlined_call_operand.hbm [shape: f32[2,32], index: 1, kind: output, shape index: {}]
  %s2 = sld [smem:[#allocation0]]
  $region26: #{tpu_custom_call.1} parent=0
    _
  %s4 = ssub.s32 1, %s2
  %s5 = scalar_select 0, %s4, %s2
  $region1: #{tpu_custom_call.1} parent=0
    #allocation3 [shape = 'u8[8192]{0}', space=vmem, size = 0x2000, scoped, tag = 'input window, operand 0, single buffered']
    #allocation4 [shape = 's32[1]{0}', space=sflag, size = 0x4, scoped, tag = 'scoped memory for tpu_custom_call.1']
    #allocation5 [shape = 's32[1]{0}', space=sflag, size = 0x4, scoped, tag = 'scoped memory for tpu_custom_call.1']
    #allocation6 [shape = 'u8[1024]{0}', space=vmem, size = 0x400, scoped, tag = 'output window, operand 0, single buffered']
    %6 = vsyncpa [#allocation4], 0
    %7 = vsyncpa [#allocation5], 0
    // Predicated region
    $region2: #{tpu_custom_call.1} parent=1 // pred_check
      _
    $region3: #{tpu_custom_call.1} parent=1 // pred_check_branch
      %9 = sbr.rel (0) target = $region5
    $region4: #{tpu_custom_call.1} parent=1 // pred_region
      %s11 = ssub.s32 256, 256
      %12 = vsyncadd [#allocation4], %s11
      %s13 = sshll.u32 [#allocation3], 4
      %s14 = int_to_ptr.vmem [resolvable:$true] %s13
      %19 = dma.hbm_to_vmem [thread:$0]  %s0, 256, %s14, [#allocation4], 128, 128, 8
    $region5: #{tpu_custom_call.1} parent=1 // pred_fallthru
      _
    // Predicated region
    $region6: #{tpu_custom_call.1} parent=1 // pred_check
      _
    $region7: #{tpu_custom_call.1} parent=1 // pred_check_branch
      %21 = sbr.rel (0) target = $region9
    $region8: #{tpu_custom_call.1} parent=1 // pred_region
      %22 = dma.done [#allocation4], 256
    $region9: #{tpu_custom_call.1} parent=1 // pred_fallthru
      _
    %p23 = scmp.eq.s32.totalorder 0, 0
    // Predicated region
    $region10: #{tpu_custom_call.1} parent=1 // pred_check
      %p24 = pneg %p23
    $region11: #{tpu_custom_call.1} parent=1 // pred_check_branch
      %26 = sbr.rel (%p24) target = $region13
    $region12: #{tpu_custom_call.1} parent=1 // pred_region
      %vm27 = vcmask 254976
      %28 = vst.msk [vmem:[#allocation2] sm:$0x3] %vm27, 0.0
    $region13: #{tpu_custom_call.1} parent=1 // pred_fallthru
      _
    %v29 = vld [vmem:[#allocation3] sm:$0xff]
    %v30 = vld [vmem:[#allocation3 + $0x8] sm:$0xff]
    %v31 = vld [vmem:[#allocation2] sm:$0x3]
    %vm32 = vcmask 261120
    %v33 = vsel %vm32, %v29, 0.0
    %v34 = vrot.slane %v33, 4
    %v35 = vadd.f32 %v33, %v34
    %v36 = vrot.slane %v35, 2
    %v37 = vadd.f32 %v35, %v36
    %v38 = vrot.slane %v37, 1
    %v39 = vadd.f32 %v37, %v38
    %v40 = vsel %vm32, %v30, 0.0
    %v41 = vrot.slane %v40, 4
    %v42 = vadd.f32 %v40, %v41
    %v43 = vrot.slane %v42, 2
    %v44 = vadd.f32 %v42, %v43
    %v45 = vrot.slane %v44, 1
    %v46 = vadd.f32 %v44, %v45
    %vm49 = vcmask 1041409
    %v50 = vsel %vm49, %v46, %v39
    %v52 = vadd.f32 %v31, %v50
    %vm53 = vcmask 254976
    %54 = vst.msk [vmem:[#allocation2] sm:$0x3] %vm53, %v52
    // Predicated region
    $region14: #{tpu_custom_call.1} parent=1 // pred_check
      %p55 = pneg %p23
    $region15: #{tpu_custom_call.1} parent=1 // pred_check_branch
      %57 = sbr.rel (%p55) target = $region17
    $region16: #{tpu_custom_call.1} parent=1 // pred_region
      %v58 = vld [vmem:[#allocation2] sm:$0x3]
      %v59 = vmul.f32 %v58, 0.125
      %60 = vst.msk [vmem:[#allocation6] sm:$0x3] %vm53, %v59
    $region17: #{tpu_custom_call.1} parent=1 // pred_fallthru
      _
    // Predicated region
    $region18: #{tpu_custom_call.1} parent=1 // pred_check
      _
    $region19: #{tpu_custom_call.1} parent=1 // pred_check_branch
      %62 = sbr.rel (0) target = $region21
    $region20: #{tpu_custom_call.1} parent=1 // pred_region
      %s64 = ssub.s32 32, 32
      %65 = vsyncadd [#allocation5], %s64
      %s67 = sshll.u32 [#allocation6], 4
      %s68 = int_to_ptr.vmem [resolvable:$true] %s67
      %70 = dma.vmem_to_hbm [thread:$0]  %s68, 32, %s1, [#allocation5]
    $region21: #{tpu_custom_call.1} parent=1 // pred_fallthru
      _
    // Predicated region
    $region22: #{tpu_custom_call.1} parent=1 // pred_check
      _
    $region23: #{tpu_custom_call.1} parent=1 // pred_check_branch
      %72 = sbr.rel (0) target = $region25
    $region24: #{tpu_custom_call.1} parent=1 // pred_region
      %73 = dma.done [#allocation5], 32
    $region25: #{tpu_custom_call.1} parent=1 // pred_fallthru
      _
    %74 = vsyncpa [#allocation4], 1
    %75 = vsyncpa [#allocation5], 1

</llo_original>
